<compile_context>
chip_gen: v7x
topology: tpu7x:2x2x1
jax: 0.10.0
libtpu: 0.0.40
codegen_flags: <defaults>
</compile_context>

<pallas_src>
import functools

import jax
import jax.numpy as jnp
import numpy as np
from jax.experimental import pallas as pl
from jax.experimental.pallas import tpu as pltpu


# ----------------------------- device-aware budgets -----------------------------

def _vmem_capacity_bytes():
    try:
        info = pltpu.get_tpu_info()
        return int(getattr(info, "vmem_capacity_bytes", 128 << 20))
    except Exception:
        return 128 << 20


_VMEM_PHYS = _vmem_capacity_bytes()
_VMEM_LIMIT = int(min(_VMEM_PHYS // 2, 64 << 20))       # 64 MiB on v5e/v6e, 32 MiB on v7x
_MAX_BLOCK_BYTES = int(max(4 << 20, _VMEM_LIMIT // 8))  # per-buffer cap (double-buffered)
_TARGET_ROWS = 1024          # dense kernels: big tiles amortize ~0.35us/step
_GATHER_ROWS = 256           # sampled rows per grid step (fills MXU M on v6e/v7x)
_FUSED_GATHER_MIN_ROWS = 2 * _GATHER_ROWS  # below this, XLA take + dense kernel wins


def _round_up(n, m):
    return ((n + m - 1) // m) * m


def _pick_row_block(n_rows, row_bytes, multiple=8):
    by_vmem = max(multiple,
                  (_MAX_BLOCK_BYTES // max(row_bytes, 1)) // multiple * multiple)
    return int(min(_TARGET_ROWS, by_vmem, _round_up(max(n_rows, 1), multiple)))


def _pick_gather_block(c_in, itemsize):
    # xbuf is double-buffered, so 2x the per-row bytes count against the cap.
    by_vmem = max(8, (_MAX_BLOCK_BYTES // max(2 * c_in * itemsize, 1)) // 8 * 8)
    return int(min(_GATHER_ROWS, by_vmem))


def _largest_divisor_block(total, row_bytes, multiple=8):
    """Largest multiple-of-`multiple` divisor of `total` whose block fits the cap."""
    if total % multiple != 0:
        return total
    cap = max(multiple, _MAX_BLOCK_BYTES // max(row_bytes, 1))
    best, d = multiple, multiple
    while d <= total:
        if total % d == 0 and d <= cap:
            best = d
        d += multiple
    return best


def _pad_rows(x, block):
    n = x.shape[0]
    n_pad = _round_up(n, block)
    if n_pad != n:
        x = jnp.pad(x, ((0, n_pad - n), (0, 0)))
    return x, n_pad


def _pad_ids(ids, block):
    total = ids.shape[0]
    p_pad = _round_up(total, block)
    if p_pad != total:
        # Padded ids gather row 0 (valid address); padded rows are sliced off.
        ids = jnp.concatenate([ids, jnp.zeros((p_pad - total,), ids.dtype)])
    return ids, total, p_pad


# ----------------------------- in-kernel math -----------------------------

def _l2norm_rows(y):
    # Sum-of-squares reduce runs on the XLU; the reciprocal goes to the EUP slot
    # (approx=True) instead of a VALU divide.  Epsilon placement matches the
    # PyTorch reference: x / (norm + 1e-7).
    norm = jnp.sqrt(jnp.sum(y * y, axis=-1, keepdims=True))
    return y * pl.reciprocal(norm + 1e-7, approx=True)


def _mlp_math(x, w1_ref, b1_ref, w2_ref, b2_ref, normalize):
    # bf16 MXU operands (one cast, no f32 round trip), f32 accumulation;
    # bias / ReLU / norm stay in f32.
    h = jnp.dot(x.astype(jnp.bfloat16), w1_ref[...],
                preferred_element_type=jnp.float32) + b1_ref[...]
    h = jnp.maximum(h, 0.0)
    y = jnp.dot(h.astype(jnp.bfloat16), w2_ref[...],
                preferred_element_type=jnp.float32) + b2_ref[...]
    return _l2norm_rows(y) if normalize else y


# ----------------------------- fused gather (flat ids, double-buffered) -----------------------------

def _pipelined_row_gather(idx_ref, feat_ref, xbuf, sem, *, row_block):
    """Gather row_block token rows by flat id with a 2-deep pipeline across grid steps.

    Block j's rows were DMA'd into xbuf[j%2] during step j-1 (block 0 during step 0);
    step j issues block j+1's DMAs into the other slot *before* draining its own, so
    the HBM gather runs under the MXU work of the current block.  Returns the slot
    holding block j.
    """
    j = pl.program_id(0)
    nblk = pl.num_programs(0)
    slot = j % 2

    def issue(block, into_slot):
        base = block * row_block

        def body(r, carry):
            row = idx_ref[base + r]          # flat token index in [B*HW, C]
            pltpu.make_async_copy(feat_ref.at[pl.ds(row, 1), :],
                                  xbuf.at[into_slot, pl.ds(r, 1), :],
                                  sem.at[into_slot]).start()
            return carry

        jax.lax.fori_loop(0, row_block, body, 0, unroll=8)

    @pl.when(j == 0)
    def _():
        issue(0, 0)                          # prime the pipeline

    @pl.when(j + 1 < nblk)
    def _():
        issue(j + 1, 1 - slot)               # prefetch next block (other slot/sem)

    def drain(r, carry):
        # Every copy on this sem slot has an identical byte count, so one wait per
        # issued copy drains them regardless of completion order.
        pltpu.make_async_copy(feat_ref.at[pl.ds(0, 1), :],
                              xbuf.at[slot, pl.ds(r, 1), :],
                              sem.at[slot]).wait()
        return carry

    jax.lax.fori_loop(0, row_block, drain, 0, unroll=8)
    return slot


def _gather_mlp_kernel(idx_ref, feat_ref, w1_ref, b1_ref, w2_ref, b2_ref,
                       o_ref, xbuf, sem, *, row_block):
    slot = _pipelined_row_gather(idx_ref, feat_ref, xbuf, sem, row_block=row_block)
    y = _mlp_math(xbuf[slot], w1_ref, b1_ref, w2_ref, b2_ref, normalize=True)
    o_ref[...] = y.astype(o_ref.dtype)


def _gather_l2norm_kernel(idx_ref, feat_ref, o_ref, xbuf, sem, *, row_block):
    slot = _pipelined_row_gather(idx_ref, feat_ref, xbuf, sem, row_block=row_block)
    o_ref[...] = _l2norm_rows(xbuf[slot].astype(jnp.float32)).astype(o_ref.dtype)


def gather_mlp_l2norm_pallas(feat_flat, flat_ids, w1, b1, w2, b2):
    """feat_flat: [B*HW, C]; flat_ids: [B*P] int32 -> [B*P, nc] (MLP + L2 norm)."""
    c_in = feat_flat.shape[1]
    nc = w1.shape[1]
    row_block = _pick_gather_block(c_in, feat_flat.dtype.itemsize)
    ids, total, p_pad = _pad_ids(flat_ids.astype(jnp.int32), row_block)
    nblk = p_pad // row_block
    kernel = functools.partial(_gather_mlp_kernel, row_block=row_block)
    out = pl.pallas_call(
        kernel,
        out_shape=jax.ShapeDtypeStruct((p_pad, nc), feat_flat.dtype),
        grid_spec=pltpu.PrefetchScalarGridSpec(
            num_scalar_prefetch=1,                      # flat ids land in SMEM
            grid=(nblk,),
            in_specs=[
                pl.BlockSpec(memory_space=pl.ANY),      # tokens stay in HBM; rows are DMA'd
                # constant index_maps -> weight/bias blocks stay VMEM-resident
                # TODO(synk): pipeline_mode=pl.Buffered(1) would halve weight VMEM.
                pl.BlockSpec((c_in, nc), lambda j, idx: (0, 0)),
                pl.BlockSpec((1, nc), lambda j, idx: (0, 0)),
                pl.BlockSpec((nc, nc), lambda j, idx: (0, 0)),
                pl.BlockSpec((1, nc), lambda j, idx: (0, 0)),
            ],
            out_specs=pl.BlockSpec((row_block, nc), lambda j, idx: (j, 0)),
            scratch_shapes=[
                pltpu.VMEM((2, row_block, c_in), feat_flat.dtype),
                pltpu.SemaphoreType.DMA((2,)),
            ],
        ),
        compiler_params=pltpu.CompilerParams(
            # "arbitrary": the gather pipeline carries the prefetched block across
            # grid steps, so this axis must not be core-split.
            # TODO(synk): a (core, block) outer grid would recover v7x megacore.
            dimension_semantics=("arbitrary",),
            vmem_limit_bytes=_VMEM_LIMIT),
    )(ids, feat_flat, w1, b1, w2, b2)
    return out[:total]


def gather_l2norm_pallas(feat_flat, flat_ids):
    """feat_flat: [B*HW, C]; flat_ids: [B*P] int32 -> [B*P, C] (L2 norm only)."""
    c_in = feat_flat.shape[1]
    row_block = _pick_gather_block(c_in, feat_flat.dtype.itemsize)
    ids, total, p_pad = _pad_ids(flat_ids.astype(jnp.int32), row_block)
    nblk = p_pad // row_block
    kernel = functools.partial(_gather_l2norm_kernel, row_block=row_block)
    out = pl.pallas_call(
        kernel,
        out_shape=jax.ShapeDtypeStruct((p_pad, c_in), feat_flat.dtype),
        grid_spec=pltpu.PrefetchScalarGridSpec(
            num_scalar_prefetch=1,
            grid=(nblk,),
            in_specs=[pl.BlockSpec(memory_space=pl.ANY)],
            out_specs=pl.BlockSpec((row_block, c_in), lambda j, idx: (j, 0)),
            scratch_shapes=[
                pltpu.VMEM((2, row_block, c_in), feat_flat.dtype),
                pltpu.SemaphoreType.DMA((2,)),
            ],
        ),
        compiler_params=pltpu.CompilerParams(
            dimension_semantics=("arbitrary",),
            vmem_limit_bytes=_VMEM_LIMIT),
    )(ids, feat_flat)
    return out[:total]


# ----------------------------- dense kernels -----------------------------

def _mlp_kernel(x_ref, w1_ref, b1_ref, w2_ref, b2_ref, o_ref, *, normalize):
    y = _mlp_math(x_ref[...], w1_ref, b1_ref, w2_ref, b2_ref, normalize)
    o_ref[...] = y.astype(o_ref.dtype)


def _l2norm_kernel(x_ref, o_ref):
    o_ref[...] = _l2norm_rows(x_ref[...].astype(jnp.float32)).astype(o_ref.dtype)


def _spatial_sumsq_kernel(y_ref, o_ref):
    @pl.when(pl.program_id(1) == 0)
    def _():
        o_ref[...] = jnp.zeros_like(o_ref)
    blk = y_ref[...].astype(jnp.float32)
    o_ref[...] += jnp.sum(blk * blk, axis=1, keepdims=True)


def mlp_pallas(x, w1, b1, w2, b2, *, normalize=False, out_dtype=None):
    """x: [N, C_in] (bf16 or f32) -> [N, nc]; Linear-ReLU-Linear (+ optional L2 norm)."""
    n, c_in = x.shape
    nc = w1.shape[1]
    out_dtype = x.dtype if out_dtype is None else out_dtype
    row_bytes = c_in * x.dtype.itemsize + nc * jnp.dtype(out_dtype).itemsize
    row_block = _pick_row_block(n, row_bytes, multiple=16)   # 16: safe for bf16 tiles
    x_p, n_pad = _pad_rows(x, row_block)
    kernel = functools.partial(_mlp_kernel, normalize=normalize)
    out = pl.pallas_call(
        kernel,
        out_shape=jax.ShapeDtypeStruct((n_pad, nc), out_dtype),
        grid_spec=pltpu.PrefetchScalarGridSpec(
            num_scalar_prefetch=0,
            grid=(n_pad // row_block,),
            in_specs=[
                pl.BlockSpec((row_block, c_in), lambda i: (i, 0)),
                pl.BlockSpec((c_in, nc), lambda i: (0, 0)),
                pl.BlockSpec((1, nc), lambda i: (0, 0)),
                pl.BlockSpec((nc, nc), lambda i: (0, 0)),
                pl.BlockSpec((1, nc), lambda i: (0, 0)),
            ],
            out_specs=pl.BlockSpec((row_block, nc), lambda i: (i, 0)),
        ),
        compiler_params=pltpu.CompilerParams(
            dimension_semantics=("parallel",),
            vmem_limit_bytes=_VMEM_LIMIT),
    )(x_p, w1, b1, w2, b2)
    return out[:n]


def l2norm_pallas(x):
    """x: [N, D] -> [N, D]; L2-normalize each row over the last (lane) dim."""
    n, d = x.shape
    row_block = _pick_row_block(n, 2 * d * x.dtype.itemsize, multiple=8)
    x_p, n_pad = _pad_rows(x, row_block)
    out = pl.pallas_call(
        _l2norm_kernel,
        out_shape=jax.ShapeDtypeStruct((n_pad, d), x.dtype),
        grid_spec=pltpu.PrefetchScalarGridSpec(
            num_scalar_prefetch=0,
            grid=(n_pad // row_block,),
            in_specs=[pl.BlockSpec((row_block, d), lambda i: (i, 0))],
            out_specs=pl.BlockSpec((row_block, d), lambda i: (i, 0)),
        ),
        compiler_params=pltpu.CompilerParams(
            dimension_semantics=("parallel",),
            vmem_limit_bytes=_VMEM_LIMIT),
    )(x_p)
    return out[:n]


def spatial_sumsq_pallas(y):
    """y: [B, HW, C] -> [B, 1, C]; sum of squares over the spatial (HW) axis."""
    B, HW, C = y.shape
    hw_block = _largest_divisor_block(HW, C * y.dtype.itemsize, multiple=8)
    return pl.pallas_call(
        _spatial_sumsq_kernel,
        out_shape=jax.ShapeDtypeStruct((B, 1, C), jnp.float32),
        grid_spec=pltpu.PrefetchScalarGridSpec(
            num_scalar_prefetch=0,
            grid=(B, HW // hw_block),
            in_specs=[pl.BlockSpec((1, hw_block, C), lambda b, j: (b, j, 0))],
            out_specs=pl.BlockSpec((1, 1, C), lambda b, j: (b, 0, 0)),
        ),
        compiler_params=pltpu.CompilerParams(
            dimension_semantics=("parallel", "arbitrary"),
            vmem_limit_bytes=_VMEM_LIMIT),
    )(y)


# ----------------------------- module port -----------------------------

class PatchSampleF:
    """JAX/Pallas port of networks/gan.py::PatchSampleF (forward semantics)."""

    def __init__(self, use_mlp=False, init_type="normal", init_gain=0.02, nc=256,
                 param_key=None):
        self.use_mlp = use_mlp
        self.nc = nc
        self.init_type = init_type
        self.init_gain = init_gain
        self.mlp_init = False
        self.mlps = {}
        self._param_key = param_key if param_key is not None else jax.random.PRNGKey(0)

    def create_mlp(self, feats):
        # nn.Linear(input_nc, nc) -> ReLU -> nn.Linear(nc, nc);
        # init_type='normal': weight ~ N(0, init_gain), bias = 0.
        # TODO(synk): only the 'normal' init used by CUT is implemented.
        key = self._param_key
        for mlp_id, feat in enumerate(feats):
            input_nc = feat.shape[1]  # NCHW channel dim
            key, k1, k2 = jax.random.split(key, 3)
            # Weights kept in bf16: they are MXU operands anyway; halves weight DMA.
            w1 = (self.init_gain *
                  jax.random.normal(k1, (input_nc, self.nc), jnp.float32)
                  ).astype(jnp.bfloat16)
            b1 = jnp.zeros((1, self.nc), jnp.float32)
            w2 = (self.init_gain *
                  jax.random.normal(k2, (self.nc, self.nc), jnp.float32)
                  ).astype(jnp.bfloat16)
            b2 = jnp.zeros((1, self.nc), jnp.float32)
            self.mlps[mlp_id] = (w1, b1, w2, b2)
        self.mlp_init = True

    def __call__(self, feats, num_patches=64, patch_ids=None, sample_key=None):
        return_ids, return_feats = [], []
        if self.use_mlp and not self.mlp_init:
            self.create_mlp(feats)
        if sample_key is None:
            sample_key = jax.random.PRNGKey(1)
        for feat_id, feat in enumerate(feats):
            B, C, H, W = feat.shape
            HW = H * W
            if num_patches > 0:
                if patch_ids is not None:
                    patch_id = jnp.asarray(patch_ids[feat_id], jnp.int32)
                else:
                    sample_key, sub = jax.random.split(sample_key)
                    patch_id = jax.random.permutation(sub, HW)[
                        : int(min(num_patches, HW))].astype(jnp.int32)
                return_ids.append(patch_id)
                # NCHW -> [B*HW, C] tokens (channels lane-dense).
                # TODO(synk): the token slab stays f32; a bf16 slab would halve gather
                # bytes but single-row bf16 DMAs straddle packed sublane pairs.
                feat_flat = jnp.transpose(feat, (0, 2, 3, 1)).reshape(B * HW, C)
                P = int(patch_id.shape[0])
                total = B * P
                flat_ids = (jnp.arange(B, dtype=jnp.int32)[:, None] * HW
                            + patch_id[None, :]).reshape(-1)          # [B*P]
                if self.use_mlp:
                    w1, b1, w2, b2 = self.mlps[feat_id]
                    if total >= _FUSED_GATHER_MIN_ROWS:
                        # Fused HBM row gather + MLP + L2 norm (double-buffered DMAs).
                        x_out = gather_mlp_l2norm_pallas(feat_flat, flat_ids,
                                                         w1, b1, w2, b2)
                    else:
                        # Few rows: per-row DMA latency has nothing to hide behind;
                        # one XLA gather + dense bf16 MLP kernel is cheaper.
                        x = jnp.take(feat_flat, flat_ids, axis=0).astype(jnp.bfloat16)
                        x_out = mlp_pallas(x, w1, b1, w2, b2, normalize=True,
                                           out_dtype=feat.dtype)
                else:
                    if total >= _FUSED_GATHER_MIN_ROWS:
                        x_out = gather_l2norm_pallas(feat_flat, flat_ids)
                    else:
                        x_out = l2norm_pallas(jnp.take(feat_flat, flat_ids, axis=0))
                return_feats.append(x_out)
            else:
                return_ids.append([])
                if self.use_mlp:
                    # MLP over channels, then L2-normalize over the spatial dim
                    # (matches torch: l2norm acts on dim 1 == H*W here).
                    w1, b1, w2, b2 = self.mlps[feat_id]
                    x_tok = jnp.transpose(feat, (0, 2, 3, 1)).reshape(
                        B * HW, C).astype(jnp.bfloat16)
                    y = mlp_pallas(x_tok, w1, b1, w2, b2, normalize=False,
                                   out_dtype=jnp.float32)              # [B*HW, nc]
                    y3 = y.reshape(B, HW, self.nc)
                    # Pallas spatial sum-of-squares; the divide rides the final NCHW
                    # transpose in a single fused XLA pass (no extra HBM round trip).
                    # TODO(synk): a Pallas pass-2 with a transposed output BlockSpec
                    # would fuse the last pass too.
                    ssq = spatial_sumsq_pallas(y3)                      # [B, 1, nc]
                    norm_t = jnp.swapaxes(jnp.sqrt(ssq) + 1e-7, 1, 2)   # [B, nc, 1]
                    x_out = (jnp.swapaxes(y3, 1, 2) / norm_t).reshape(
                        B, self.nc, H, W).astype(feat.dtype)
                else:
                    # L2-normalize each channel map over H*W (NCHW rows are already
                    # contiguous; no transpose needed).
                    rows = feat.reshape(B * C, HW)
                    x_out = l2norm_pallas(rows).reshape(B, C, H, W)
                return_feats.append(x_out)
        return return_feats, return_ids


# ----------------------------- references / main -----------------------------

def _ref_mlp(x, w1, b1, w2, b2):
    # Mirrors the kernel's bf16-operand / f32-accumulate MXU math.
    h = jnp.dot(x.astype(jnp.bfloat16), w1, preferred_element_type=jnp.float32) + b1
    h = jnp.maximum(h, 0.0)
    return jnp.dot(h.astype(jnp.bfloat16), w2, preferred_element_type=jnp.float32) + b2


def _ref_l2norm(y, axis=-1):
    norm = jnp.sqrt(jnp.sum(y * y, axis=axis, keepdims=True))
    return y / (norm + 1e-7)


if __name__ == "__main__":
    key = jax.random.PRNGKey(0)
    k_feat, k_ids, k_feat2, k_ids2 = jax.random.split(key, 4)

    TOL = dict(rtol=1e-2, atol=1e-2)   # bf16 MXU operands + EUP approx reciprocal

    # --- small feature map: exercises the XLA-gather fallback + dense kernels ---
    B, C, H, W = 2, 4, 16, 16
    NC = 32
    P = 8
    HW = H * W
    feat = jax.random.normal(k_feat, (B, C, H, W), jnp.float32)     # NCHW
    feat_tok = jnp.transpose(feat, (0, 2, 3, 1)).reshape(B, HW, C)
    patch_id = jax.random.permutation(k_ids, HW)[:P].astype(jnp.int32)
    x_sample = feat_tok[:, patch_id, :].reshape(-1, C)              # [B*P, C]

    # 1) use_mlp=True, small num_patches: XLA gather + dense bf16 MLP + L2 norm.
    m1 = PatchSampleF(use_mlp=True, nc=NC, param_key=jax.random.PRNGKey(42))
    (o1,), _ = m1([feat], num_patches=P, patch_ids=[patch_id])
    o1 = jax.block_until_ready(o1)
    assert o1.shape == (B * P, NC), o1.shape
    w1, b1, w2, b2 = m1.mlps[0]
    ref1 = _ref_l2norm(_ref_mlp(x_sample, w1, b1, w2, b2))
    np.testing.assert_allclose(np.asarray(o1), np.asarray(ref1), **TOL)

    # 2) use_mlp=False, small num_patches: XLA gather + L2 norm kernel.
    m2 = PatchSampleF(use_mlp=False, nc=NC)
    (o2,), _ = m2([feat], num_patches=P, patch_ids=[patch_id])
    o2 = jax.block_until_ready(o2)
    assert o2.shape == (B * P, C), o2.shape
    np.testing.assert_allclose(np.asarray(o2), np.asarray(_ref_l2norm(x_sample)), **TOL)

    # 3) use_mlp=False, num_patches==0: spatial L2 norm, output back to NCHW.
    m3 = PatchSampleF(use_mlp=False, nc=NC)
    (o3,), _ = m3([feat], num_patches=0)
    o3 = jax.block_until_ready(o3)
    assert o3.shape == (B, C, H, W), o3.shape
    ref3 = _ref_l2norm(feat.reshape(B * C, HW)).reshape(B, C, H, W)
    np.testing.assert_allclose(np.asarray(o3), np.asarray(ref3), **TOL)

    # 4) use_mlp=True, num_patches==0: MLP + Pallas spatial sum-of-squares + NCHW out.
    m4 = PatchSampleF(use_mlp=True, nc=NC, param_key=jax.random.PRNGKey(7))
    (o4,), _ = m4([feat], num_patches=0)
    o4 = jax.block_until_ready(o4)
    assert o4.shape == (B, NC, H, W), o4.shape
    w1, b1, w2, b2 = m4.mlps[0]
    y4 = _ref_mlp(feat_tok.reshape(B * HW, C), w1, b1, w2, b2).reshape(B, HW, NC)
    ref4 = jnp.transpose(_ref_l2norm(y4, axis=1), (0, 2, 1)).reshape(B, NC, H, W)
    np.testing.assert_allclose(np.asarray(o4), np.asarray(ref4), **TOL)

    # --- larger feature map: exercises the fused double-buffered gather kernels ---
    B2, C2, H2, W2, P2 = 2, 8, 32, 32, 512
    HW2 = H2 * W2
    feat2 = jax.random.normal(k_feat2, (B2, C2, H2, W2), jnp.float32)
    feat2_tok = jnp.transpose(feat2, (0, 2, 3, 1)).reshape(B2, HW2, C2)
    patch_id2 = jax.random.permutation(k_ids2, HW2)[:P2].astype(jnp.int32)
    x_sample2 = feat2_tok[:, patch_id2, :].reshape(-1, C2)          # [B2*P2, C2]

    # 5) fused gather + MLP + L2 norm (flat-id grid, pipelined row DMAs).
    m5 = PatchSampleF(use_mlp=True, nc=NC, param_key=jax.random.PRNGKey(3))
    (o5,), _ = m5([feat2], num_patches=P2, patch_ids=[patch_id2])
    o5 = jax.block_until_ready(o5)
    assert o5.shape == (B2 * P2, NC), o5.shape
    w1, b1, w2, b2 = m5.mlps[0]
    ref5 = _ref_l2norm(_ref_mlp(x_sample2, w1, b1, w2, b2))
    np.testing.assert_allclose(np.asarray(o5), np.asarray(ref5), **TOL)

    # 6) fused gather + L2 norm (no MLP).
    m6 = PatchSampleF(use_mlp=False, nc=NC)
    (o6,), _ = m6([feat2], num_patches=P2, patch_ids=[patch_id2])
    o6 = jax.block_until_ready(o6)
    assert o6.shape == (B2 * P2, C2), o6.shape
    np.testing.assert_allclose(np.asarray(o6), np.asarray(_ref_l2norm(x_sample2)), **TOL)

    print("KERNEL_OK")
</pallas_src>

<mosaic_0001>
module attributes {stable_mosaic.version = 11 : i64} {
  func.func @_mlp_kernel(%arg0: i32, %arg1: memref<16x4xbf16, #tpu.memory_space<vmem>>, %arg2: memref<4x32xbf16, #tpu.memory_space<vmem>>, %arg3: memref<1x32xf32, #tpu.memory_space<vmem>>, %arg4: memref<32x32xbf16, #tpu.memory_space<vmem>>, %arg5: memref<1x32xf32, #tpu.memory_space<vmem>>, %arg6: memref<16x32xf32, #tpu.memory_space<vmem>>) attributes {dimension_semantics = [#tpu.dimension_semantics<parallel>], iteration_bounds = array<i64: 1>, scalar_prefetch = 0 : i64, scratch_operands = 0 : i64, tpu.core_type = #tpu.core_type<tc>, window_params = [{transform_indices = @transform_0, window_bounds = array<i64: 16, 4>}, {pipeline_mode = #tpu.pipeline_mode<synchronous>, transform_indices = @transform_1, window_bounds = array<i64: 4, 32>}, {pipeline_mode = #tpu.pipeline_mode<synchronous>, transform_indices = @transform_2, window_bounds = array<i64: 1, 32>}, {pipeline_mode = #tpu.pipeline_mode<synchronous>, transform_indices = @transform_3, window_bounds = array<i64: 32, 32>}, {pipeline_mode = #tpu.pipeline_mode<synchronous>, transform_indices = @transform_4, window_bounds = array<i64: 1, 32>}, {transform_indices = @transform_5, window_bounds = array<i64: 16, 32>}]} {
    %c0 = arith.constant 0 : index
    %c0_0 = arith.constant 0 : index
    %0 = vector.load %arg1[%c0, %c0_0] : memref<16x4xbf16, #tpu.memory_space<vmem>>, vector<16x4xbf16>
    %c0_1 = arith.constant 0 : index
    %c0_2 = arith.constant 0 : index
    %1 = vector.load %arg2[%c0_1, %c0_2] : memref<4x32xbf16, #tpu.memory_space<vmem>>, vector<4x32xbf16>
    %cst = arith.constant dense<0.000000e+00> : vector<16x32xf32>
    %2 = tpu.matmul %0, %1, %cst {dimension_numbers = #tpu.dot_dimension_numbers<[1], [0], [0], [1], [0, 0, 1, 1], [], []>} : vector<16x4xbf16>, vector<4x32xbf16>, vector<16x32xf32> -> vector<16x32xf32>
    %c0_3 = arith.constant 0 : index
    %c0_4 = arith.constant 0 : index
    %3 = vector.load %arg3[%c0_3, %c0_4] : memref<1x32xf32, #tpu.memory_space<vmem>>, vector<1x32xf32>
    %4 = vector.broadcast %3 : vector<1x32xf32> to vector<16x32xf32>
    %5 = arith.addf %2, %4 : vector<16x32xf32>
    %cst_5 = arith.constant 0.000000e+00 : f32
    %6 = vector.broadcast %cst_5 : f32 to vector<16x32xf32>
    %7 = arith.maximumf %5, %6 : vector<16x32xf32>
    %8 = arith.truncf %7 : vector<16x32xf32> to vector<16x32xbf16>
    %c0_6 = arith.constant 0 : index
    %c0_7 = arith.constant 0 : index
    %9 = vector.load %arg4[%c0_6, %c0_7] : memref<32x32xbf16, #tpu.memory_space<vmem>>, vector<32x32xbf16>
    %cst_8 = arith.constant dense<0.000000e+00> : vector<16x32xf32>
    %10 = tpu.matmul %8, %9, %cst_8 {dimension_numbers = #tpu.dot_dimension_numbers<[1], [0], [0], [1], [0, 0, 1, 1], [], []>} : vector<16x32xbf16>, vector<32x32xbf16>, vector<16x32xf32> -> vector<16x32xf32>
    %c0_9 = arith.constant 0 : index
    %c0_10 = arith.constant 0 : index
    %11 = vector.load %arg5[%c0_9, %c0_10] : memref<1x32xf32, #tpu.memory_space<vmem>>, vector<1x32xf32>
    %12 = vector.broadcast %11 : vector<1x32xf32> to vector<16x32xf32>
    %13 = arith.addf %10, %12 : vector<16x32xf32>
    %14 = arith.mulf %13, %13 : vector<16x32xf32>
    %cst_11 = arith.constant dense<0.000000e+00> : vector<16xf32>
    %15 = vector.multi_reduction <add>, %14, %cst_11 [1] : vector<16x32xf32> to vector<16xf32>
    %16 = vector.shape_cast %15 : vector<16xf32> to vector<16x1xf32>
    %17 = math.sqrt %16 : vector<16x1xf32>
    %cst_12 = arith.constant 1.000000e-07 : f32
    %18 = vector.broadcast %cst_12 : f32 to vector<16x1xf32>
    %19 = arith.addf %17, %18 : vector<16x1xf32>
    %20 = tpu.reciprocal %19 {approx = true} : vector<16x1xf32> -> vector<16x1xf32>
    %21 = vector.broadcast %20 : vector<16x1xf32> to vector<16x32xf32>
    %22 = arith.mulf %13, %21 : vector<16x32xf32>
    %c0_13 = arith.constant 0 : index
    %c0_14 = arith.constant 0 : index
    %23 = vector.load %arg6[%c0_13, %c0_14] : memref<16x32xf32, #tpu.memory_space<vmem>>, vector<16x32xf32>
    tpu.vector_store %arg6[%c0_13, %c0_14], %22 {strides = array<i32>} : memref<16x32xf32, #tpu.memory_space<vmem>>, vector<16x32xf32>,
    return
  }
  func.func @transform_0(%arg0: i32) -> (i32, i32) {
    %c0_i32 = arith.constant 0 : i32
    %c0_i32_0 = arith.constant 0 : i32
    return %arg0, %c0_i32 : i32, i32
  }
  func.func @transform_1(%arg0: i32) -> (i32, i32) {
    %c0_i32 = arith.constant 0 : i32
    %c0_i32_0 = arith.constant 0 : i32
    %c0_i32_1 = arith.constant 0 : i32
    return %c0_i32, %c0_i32_0 : i32, i32
  }
  func.func @transform_2(%arg0: i32) -> (i32, i32) {
    %c0_i32 = arith.constant 0 : i32
    %c0_i32_0 = arith.constant 0 : i32
    %c0_i32_1 = arith.constant 0 : i32
    return %c0_i32, %c0_i32_0 : i32, i32
  }
  func.func @transform_3(%arg0: i32) -> (i32, i32) {
    %c0_i32 = arith.constant 0 : i32
    %c0_i32_0 = arith.constant 0 : i32
    %c0_i32_1 = arith.constant 0 : i32
    return %c0_i32, %c0_i32_0 : i32, i32
  }
  func.func @transform_4(%arg0: i32) -> (i32, i32) {
    %c0_i32 = arith.constant 0 : i32
    %c0_i32_0 = arith.constant 0 : i32
    %c0_i32_1 = arith.constant 0 : i32
    return %c0_i32, %c0_i32_0 : i32, i32
  }
  func.func @transform_5(%arg0: i32) -> (i32, i32) {
    %c0_i32 = arith.constant 0 : i32
    %c0_i32_0 = arith.constant 0 : i32
    return %arg0, %c0_i32 : i32, i32
  }
}

</mosaic_0001>

<llo_original>
// kernel: tpu_custom_call.1
$region0: #{tpu_custom_call.1}
  #allocation0 [shape = 'u32[]', space=smem, size = 0x4, offset = 0x4, fixed_abs, tag = 'smem constant byte address 0x4 - core index']
  #allocation1 [shape = 'u32[144,128]{1,0:T(1,128)}', space=vmem, size = 0x12000, scoped, tag = 'internal scratch']
  %s0 = inlined_call_operand.hbm [shape: bf16[16,4], index: 0, kind: input, shape index: {}]
  %s1 = inlined_call_operand.hbm [shape: bf16[4,32], index: 1, kind: input, shape index: {}]
  %s2 = inlined_call_operand.hbm [shape: f32[1,32], index: 2, kind: input, shape index: {}]
  %s3 = inlined_call_operand.hbm [shape: bf16[32,32], index: 3, kind: input, shape index: {}]
  %s4 = inlined_call_operand.hbm [shape: f32[1,32], index: 4, kind: input, shape index: {}]
  %s5 = inlined_call_operand.hbm [shape: f32[16,32], index: 5, kind: output, shape index: {}]
  %s6 = sld [smem:[#allocation0]]
  $region50: #{tpu_custom_call.1} parent=0
    _
  %s8 = ssub.s32 1, %s6
  %s9 = scalar_select 0, %s8, %s6
  $region1: #{tpu_custom_call.1} parent=0
    #allocation2 [shape = 'u8[4096]{0}', space=vmem, size = 0x1000, scoped, tag = 'input window, operand 0, single buffered']
    #allocation3 [shape = 's32[1]{0}', space=sflag, size = 0x4, scoped, tag = 'scoped memory for tpu_custom_call.1']
    #allocation4 [shape = 's32[1]{0}', space=sflag, size = 0x4, scoped, tag = 'scoped memory for tpu_custom_call.1']
    #allocation5 [shape = 'u8[1024]{0}', space=vmem, size = 0x400, scoped, tag = 'input window, operand 1, single buffered']
    #allocation6 [shape = 's32[1]{0}', space=sflag, size = 0x4, scoped, tag = 'scoped memory for tpu_custom_call.1']
    #allocation7 [shape = 'u8[512]{0}', space=vmem, size = 0x400, scoped, tag = 'input window, operand 2, single buffered']
    #allocation8 [shape = 'u8[8192]{0}', space=vmem, size = 0x2000, scoped, tag = 'input window, operand 3, single buffered']
    #allocation9 [shape = 's32[1]{0}', space=sflag, size = 0x4, scoped, tag = 'scoped memory for tpu_custom_call.1']
    #allocation10 [shape = 'u8[512]{0}', space=vmem, size = 0x400, scoped, tag = 'input window, operand 4, single buffered']
    #allocation11 [shape = 'u8[8192]{0}', space=vmem, size = 0x2000, scoped, tag = 'output window, operand 0, single buffered']
    %10 = vsyncpa [#allocation3], 0
    %11 = vsyncpa [#allocation6], 0
    %12 = vsyncpa [#allocation9], 0
    %13 = vsyncpa [#allocation4], 0
    // Predicated region
    $region2: #{tpu_custom_call.1} parent=1 // pred_check
      _
    $region3: #{tpu_custom_call.1} parent=1 // pred_check_branch
      %15 = sbr.rel (0) target = $region5
    $region4: #{tpu_custom_call.1} parent=1 // pred_region
      %s17 = ssub.s32 128, 128
      %18 = vsyncadd [#allocation3], %s17
      %s19 = sshll.u32 [#allocation2], 4
      %s20 = int_to_ptr.vmem [resolvable:$true] %s19
      %25 = dma.hbm_to_vmem [thread:$0]  %s0, 128, %s20, [#allocation3], 64, 64, 4
    $region5: #{tpu_custom_call.1} parent=1 // pred_fallthru
      _
    // Predicated region
    $region6: #{tpu_custom_call.1} parent=1 // pred_check
      _
    $region7: #{tpu_custom_call.1} parent=1 // pred_check_branch
      %27 = sbr.rel (0) target = $region9
    $region8: #{tpu_custom_call.1} parent=1 // pred_region
      %s29 = ssub.s32 32, 32
      %30 = vsyncadd [#allocation6], %s29
      %s32 = sshll.u32 [#allocation5], 4
      %s33 = int_to_ptr.vmem [resolvable:$true] %s32
      %35 = dma.hbm_to_vmem [thread:$0]  %s1, 32, %s33, [#allocation6]
    $region9: #{tpu_custom_call.1} parent=1 // pred_fallthru
      _
    // Predicated region
    $region10: #{tpu_custom_call.1} parent=1 // pred_check
      _
    $region11: #{tpu_custom_call.1} parent=1 // pred_check_branch
      %37 = sbr.rel (0) target = $region13
    $region12: #{tpu_custom_call.1} parent=1 // pred_region
      %s39 = ssub.s32 16, 16
      %40 = vsyncadd [#allocation6], %s39
      %s42 = sshll.u32 [#allocation7], 4
      %s43 = int_to_ptr.vmem [resolvable:$true] %s42
      %45 = dma.hbm_to_vmem [thread:$0]  %s2, 16, %s43, [#allocation6]
    $region13: #{tpu_custom_call.1} parent=1 // pred_fallthru
      _
    // Predicated region
    $region14: #{tpu_custom_call.1} parent=1 // pred_check
      _
    $region15: #{tpu_custom_call.1} parent=1 // pred_check_branch
      %47 = sbr.rel (0) target = $region17
    $region16: #{tpu_custom_call.1} parent=1 // pred_region
      %s49 = ssub.s32 256, 256
      %50 = vsyncadd [#allocation9], %s49
      %s51 = sshll.u32 [#allocation8], 4
      %s52 = int_to_ptr.vmem [resolvable:$true] %s51
      %57 = dma.hbm_to_vmem [thread:$0]  %s3, 256, %s52, [#allocation9], 64, 64, 4
    $region17: #{tpu_custom_call.1} parent=1 // pred_fallthru
      _
    // Predicated region
    $region18: #{tpu_custom_call.1} parent=1 // pred_check
      _
    $region19: #{tpu_custom_call.1} parent=1 // pred_check_branch
      %59 = sbr.rel (0) target = $region21
    $region20: #{tpu_custom_call.1} parent=1 // pred_region
      %s61 = ssub.s32 16, 16
      %62 = vsyncadd [#allocation9], %s61
      %s64 = sshll.u32 [#allocation10], 4
      %s65 = int_to_ptr.vmem [resolvable:$true] %s64
      %67 = dma.hbm_to_vmem [thread:$0]  %s4, 16, %s65, [#allocation9]
    $region21: #{tpu_custom_call.1} parent=1 // pred_fallthru
      _
    // Predicated region
    $region22: #{tpu_custom_call.1} parent=1 // pred_check
      _
    $region23: #{tpu_custom_call.1} parent=1 // pred_check_branch
      %69 = sbr.rel (0) target = $region25
    $region24: #{tpu_custom_call.1} parent=1 // pred_region
      %70 = dma.done [#allocation3], 128
    $region25: #{tpu_custom_call.1} parent=1 // pred_fallthru
      _
    // Predicated region
    $region26: #{tpu_custom_call.1} parent=1 // pred_check
      _
    $region27: #{tpu_custom_call.1} parent=1 // pred_check_branch
      %72 = sbr.rel (0) target = $region29
    $region28: #{tpu_custom_call.1} parent=1 // pred_region
      %73 = dma.done [#allocation6], 32
    $region29: #{tpu_custom_call.1} parent=1 // pred_fallthru
      _
    // Predicated region
    $region30: #{tpu_custom_call.1} parent=1 // pred_check
      _
    $region31: #{tpu_custom_call.1} parent=1 // pred_check_branch
      %75 = sbr.rel (0) target = $region33
    $region32: #{tpu_custom_call.1} parent=1 // pred_region
      %76 = dma.done [#allocation6], 16
    $region33: #{tpu_custom_call.1} parent=1 // pred_fallthru
      _
    // Predicated region
    $region34: #{tpu_custom_call.1} parent=1 // pred_check
      _
    $region35: #{tpu_custom_call.1} parent=1 // pred_check_branch
      %78 = sbr.rel (0) target = $region37
    $region36: #{tpu_custom_call.1} parent=1 // pred_region
      %79 = dma.done [#allocation9], 256
    $region37: #{tpu_custom_call.1} parent=1 // pred_fallthru
      _
    // Predicated region
    $region38: #{tpu_custom_call.1} parent=1 // pred_check
      _
    $region39: #{tpu_custom_call.1} parent=1 // pred_check_branch
      %81 = sbr.rel (0) target = $region41
    $region40: #{tpu_custom_call.1} parent=1 // pred_region
      %82 = dma.done [#allocation9], 16
    $region41: #{tpu_custom_call.1} parent=1 // pred_fallthru
      _
    %v84 = vld [vmem:[#allocation2] sm:$0xf]
    %v85 = vld [vmem:[#allocation2 + $0x4] sm:$0xf]
    %v86 = vld [vmem:[#allocation5] sm:$0x3]
    %v87 = vld [vmem:[#allocation7] sm:$0x1]
    %v89 = vlaneseq
    %v90 = vshrl.u32 %v89, 7
    %v91 = vsub.s32 0, %v90
    %v92 = vrot.slane %v87, %v91
    %v96 = vunpack.c.l.b16 %v84
    %v97 = vunpack.c.l.b16 %v85
    %v98 = vpack.c.b16 %v97, %v96
    %vm99 = vcmask 31744
    %v101 = vsel %vm99, %v98, 0
    %vm103 = vcmask 1041408
    %v105 = vsel %vm103, %v86, 0
    %107 = vmatprep.subr.bf16.mxu0 0
    %108 = vmatpush1.bf16.msra.mxu0 %v105
    %109 = vmatprep.subr.bf16.mxu0 0
    %110 = vmatpush1.bf16.msra.mxu0 0
    %111 = vmatprep.subr.bf16.mxu0 0
    %112 = vmatpush1.bf16.msra.mxu0 0
    %113 = vmatprep.subr.bf16.mxu0 0
    %114 = vmatpush1.bf16.msra.mxu0 0
    %115 = vmatprep.subr.bf16.mxu0 0
    %116 = vmatpush1.bf16.msra.mxu0 0
    %117 = vmatprep.subr.bf16.mxu0 0
    %118 = vmatpush1.bf16.msra.mxu0 0
    %119 = vmatprep.subr.bf16.mxu0 0
    %120 = vmatpush1.bf16.msra.mxu0 0
    %121 = vmatprep.subr.bf16.mxu0 0
    %122 = vmatpush1.bf16.msra.mxu0 0
    %123 = vmatprep.subr.bf16.mxu0 0
    %124 = vmatpush1.bf16.msra.mxu0 0
    %125 = vmatprep.subr.bf16.mxu0 0
    %126 = vmatpush1.bf16.msra.mxu0 0
    %127 = vmatprep.subr.bf16.mxu0 0
    %128 = vmatpush1.bf16.msra.mxu0 0
    %129 = vmatprep.subr.bf16.mxu0 0
    %130 = vmatpush1.bf16.msra.mxu0 0
    %131 = vmatprep.subr.bf16.mxu0 0
    %132 = vmatpush1.bf16.msra.mxu0 0
    %133 = vmatprep.subr.bf16.mxu0 0
    %134 = vmatpush1.bf16.msra.mxu0 0
    %135 = vmatprep.subr.bf16.mxu0 0
    %136 = vmatpush1.bf16.msra.mxu0 0
    %137 = vmatprep.subr.bf16.mxu0 0
    %138 = vmatpush1.bf16.msra.mxu0 0
    %139 = vmatprep.mubr.bf16.mxu0 0
    %140 = vmatmul.mubr.bf16.gmra.mrb[0].mxu0 %v101
    %v141 = vpop.f32.mrb[0].mxu0
    %v142 = vadd.f32 %v92, %v141
    %v143 = vpop.f32.mrb[0].mxu0
    %v144 = vpop.f32.mrb[0].mxu0
    %v145 = vadd.f32 %v92, %v144
    %v146 = vpop.f32.mrb[0].mxu0
    %147 = vdwg.mxu0
    %v148 = vmax.f32 %v142, 0.0
    %v149 = vmax.f32 %v145, 0.0
    %v150 = vpack.c.bf16 %v149, %v148
    %v151 = vld [vmem:[#allocation8] sm:$0xf]
    %v152 = vld [vmem:[#allocation8 + $0x4] sm:$0xf]
    %v153 = vld [vmem:[#allocation8 + $0x8] sm:$0xf]
    %v154 = vld [vmem:[#allocation8 + $0xc] sm:$0xf]
    %v155 = vld [vmem:[#allocation10] sm:$0x1]
    %v157 = vlaneseq
    %v158 = vshrl.u32 %v157, 7
    %v159 = vsub.s32 0, %v158
    %v160 = vrot.slane %v155, %v159
    %v166 = vunpack.c.l.b16 %v151
    %v167 = vunpack.c.l.b16 %v152
    %v168 = vunpack.c.l.b16 %v153
    %v169 = vunpack.c.l.b16 %v154
    %v170 = vpack.c.b16 %v167, %v166
    %v171 = vpack.c.b16 %v169, %v168
    %vm174 = vcmask 261120
    %v176 = vsel %vm174, %v150, 0
    %178 = vmatprep.subr.bf16.mxu0 0
    %179 = vmatpush1.bf16.msra.mxu0 %v170
    %180 = vmatprep.subr.bf16.mxu0 0
    %181 = vmatpush1.bf16.msra.mxu0 %v171
    %182 = vmatprep.subr.bf16.mxu0 0
    %183 = vmatpush1.bf16.msra.mxu0 0
    %184 = vmatprep.subr.bf16.mxu0 0
    %185 = vmatpush1.bf16.msra.mxu0 0
    %186 = vmatprep.subr.bf16.mxu0 0
    %187 = vmatpush1.bf16.msra.mxu0 0
    %188 = vmatprep.subr.bf16.mxu0 0
    %189 = vmatpush1.bf16.msra.mxu0 0
    %190 = vmatprep.subr.bf16.mxu0 0
    %191 = vmatpush1.bf16.msra.mxu0 0
    %192 = vmatprep.subr.bf16.mxu0 0
    %193 = vmatpush1.bf16.msra.mxu0 0
    %194 = vmatprep.subr.bf16.mxu0 0
    %195 = vmatpush1.bf16.msra.mxu0 0
    %196 = vmatprep.subr.bf16.mxu0 0
    %197 = vmatpush1.bf16.msra.mxu0 0
    %198 = vmatprep.subr.bf16.mxu0 0
    %199 = vmatpush1.bf16.msra.mxu0 0
    %200 = vmatprep.subr.bf16.mxu0 0
    %201 = vmatpush1.bf16.msra.mxu0 0
    %202 = vmatprep.subr.bf16.mxu0 0
    %203 = vmatpush1.bf16.msra.mxu0 0
    %204 = vmatprep.subr.bf16.mxu0 0
    %205 = vmatpush1.bf16.msra.mxu0 0
    %206 = vmatprep.subr.bf16.mxu0 0
    %207 = vmatpush1.bf16.msra.mxu0 0
    %208 = vmatprep.subr.bf16.mxu0 0
    %209 = vmatpush1.bf16.msra.mxu0 0
    %210 = vmatprep.mubr.bf16.mxu0 0
    %211 = vmatmul.mubr.bf16.gmra.mrb[0].mxu0 %v176
    %v212 = vpop.f32.mrb[0].mxu0
    %v213 = vadd.f32 %v160, %v212
    %v214 = vpop.f32.mrb[0].mxu0
    %v215 = vpop.f32.mrb[0].mxu0
    %v216 = vadd.f32 %v160, %v215
    %v217 = vpop.f32.mrb[0].mxu0
    %218 = vdwg.mxu0
    %v219 = vmul.f32 %v213, %v213
    %v220 = vmul.f32 %v216, %v216
    %v221 = vsel %vm174, %v219, 0.0
    %222 = vadd.xlane.f32.xlu0 %v221
    %v223 = vpop.xlane.xlu0 %222
    %v224 = vsel %vm174, %v220, 0.0
    %225 = vadd.xlane.f32.xlu0 %v224
    %v226 = vpop.xlane.xlu0 %225
    %v227 = vrsqrt.pop %v223
    %v228 = vmul.f32 %v223, %v227
    %vm229 = vcmp.eq.f32.partialorder %v223, inf
    %v230 = vsel %vm229, %v223, %v228
    %vm231 = vcmp.eq.f32.partialorder %v223, 0.0
    %v232 = vand.u32 %v223, 2147483648
    %v233 = vsel %vm231, %v232, %v230
    %v234 = vrsqrt.pop %v226
    %v235 = vmul.f32 %v226, %v234
    %vm236 = vcmp.eq.f32.partialorder %v226, inf
    %v237 = vsel %vm236, %v226, %v235
    %vm238 = vcmp.eq.f32.partialorder %v226, 0.0
    %v239 = vand.u32 %v226, 2147483648
    %v240 = vsel %vm238, %v239, %v237
    %v241 = vadd.f32 %v233, 1e-07
    %v242 = vadd.f32 %v240, 1e-07
    %v243 = vrcp.pop %v241
    %v244 = vrcp.pop %v242
    %v245 = vmul.f32 %v213, %v243
    %v246 = vmul.f32 %v216, %v244
    %247 = vst.msk [vmem:[#allocation11] sm:$0xff] %vm174, %v245
    %248 = vst.msk [vmem:[#allocation11 + $0x8] sm:$0xff] %vm174, %v246
    // Predicated region
    $region42: #{tpu_custom_call.1} parent=1 // pred_check
      _
    $region43: #{tpu_custom_call.1} parent=1 // pred_check_branch
      %250 = sbr.rel (0) target = $region45
    $region44: #{tpu_custom_call.1} parent=1 // pred_region
      %s252 = ssub.s32 256, 256
      %253 = vsyncadd [#allocation4], %s252
      %s254 = sshll.u32 [#allocation11], 4
      %s255 = int_to_ptr.vmem [resolvable:$true] %s254
      %260 = dma.vmem_to_hbm [thread:$0]  %s255, 256, %s5, [#allocation4], 128, 128, 8
    $region45: #{tpu_custom_call.1} parent=1 // pred_fallthru
      _
    // Predicated region
    $region46: #{tpu_custom_call.1} parent=1 // pred_check
      _
    $region47: #{tpu_custom_call.1} parent=1 // pred_check_branch
      %262 = sbr.rel (0) target = $region49
    $region48: #{tpu_custom_call.1} parent=1 // pred_region
      %263 = dma.done [#allocation4], 256
    $region49: #{tpu_custom_call.1} parent=1 // pred_fallthru
      _
    %264 = vsyncpa [#allocation3], 1
    %265 = vsyncpa [#allocation6], 1
    %266 = vsyncpa [#allocation9], 1
    %267 = vsyncpa [#allocation4], 1

</llo_original>
